<compile_context>
chip_gen: v5e
topology: v5e:2x2
jax: 0.10.0
libtpu: 0.0.40
codegen_flags: <defaults>
</compile_context>

<pallas_src>
import jax
import jax.numpy as jnp
from jax import lax
from jax.experimental import pallas as pl
from jax.experimental.pallas import tpu as pltpu

EPS = 0.003


def _round_up(x, m):
    return (x + m - 1) // m * m


def critic_kernel(sa_ref, w_in_ref, b_in_ref,
                  w_s2_ref, b_s2_ref,
                  w2_ref, b2_ref,
                  w3_ref, b3_ref,
                  out_ref):
    # Fused first layer: [s1 || a1] = relu((state||action) @ blockdiag(Ws1, Wa1) + [bs1||ba1])
    sa = sa_ref[...].astype(jnp.bfloat16)                       # [bn, sd+ad]
    h = jnp.dot(sa, w_in_ref[...], preferred_element_type=jnp.float32)
    h = jnp.maximum(h + b_in_ref[...], 0.0)                     # [bn, 384] f32
    s1 = h[:, :256].astype(jnp.bfloat16)                        # relu(fcs1(state))
    a1 = h[:, 256:].astype(jnp.bfloat16)                        # relu(fca1(action))

    # s2 = relu(fcs2(s1))                                        -> [bn, 128]
    s2 = jnp.maximum(
        jnp.dot(s1, w_s2_ref[...], preferred_element_type=jnp.float32)
        + b_s2_ref[...], 0.0).astype(jnp.bfloat16)

    # x = relu(fc2(cat(s2, a1)))  -- single fused K=256 contraction.
    cat = jnp.concatenate([s2, a1], axis=-1)                    # [bn, 256] bf16
    x = jnp.maximum(
        jnp.dot(cat, w2_ref[...], preferred_element_type=jnp.float32)
        + b2_ref[...], 0.0)                                     # [bn, 128] f32

    # q = fc3(x) as a lane-dense [1, bn] row: contract the last dims of
    # w3 [1,128] and x [bn,128] (trans-B matmul), f32 throughout (negligible FLOPs).
    q = lax.dot_general(
        w3_ref[...], x,
        dimension_numbers=(((1,), (1,)), ((), ())),
        preferred_element_type=jnp.float32) + b3_ref[...]
    out_ref[...] = q


def _prepare_kernel_params(params):
    """Torch-layout params -> fused / bf16 kernel params (done once per call)."""
    (w_s1, b_s1, w_s2, b_s2, w_a1, b_a1, w2s, w2a, b2, w3, b3) = params
    state_dim = w_s1.shape[0]
    action_dim = w_a1.shape[0]

    # Block-diagonal fused first-layer weight:
    #   [[ Ws1   0  ],
    #    [  0   Wa1 ]]   -> [sd+ad, 384]
    w_in = jnp.zeros((state_dim + action_dim, 256 + 128), jnp.float32)
    w_in = w_in.at[:state_dim, :256].set(w_s1)
    w_in = w_in.at[state_dim:, 256:].set(w_a1)
    b_in = jnp.concatenate([b_s1, b_a1], axis=1)                # [1, 384]

    w2 = jnp.concatenate([w2s, w2a], axis=0)                    # [256, 128] unsplit

    return (w_in.astype(jnp.bfloat16), b_in,
            w_s2.astype(jnp.bfloat16), b_s2,
            w2.astype(jnp.bfloat16), b2,
            w3, b3)                                             # fc3 stays f32


def critic_forward(state, action, params, *, bn=None):
    """state: [n, state_dim], action: [n, action_dim] -> Q(s,a): [n, 1]."""
    n, state_dim = state.shape
    n_a, action_dim = action.shape
    assert n == n_a

    (w_in, b_in, w_s2, b_s2, w2, b2, w3, b3) = _prepare_kernel_params(params)

    # Batch-tile policy: 128-multiples (lane-dense output, full-sublane M).
    #  * tiny batches: one 128-row step (no per-step pipeline overhead).
    #  * big batches: tiles up to 2048 (footprint a few MB << 64 MiB VMEM on
    #    v7x), but capped so the grid has >=2 steps -> both v7x TensorCores
    #    are used via the "parallel" axis.
    if bn is None:
        n128 = _round_up(n, 128)
        if n128 <= 128:
            bn = 128
        else:
            bn = min(2048, max(128, (n128 // 2) // 128 * 128))
    else:
        bn = _round_up(bn, 128)
    n_pad = _round_up(n, bn)

    # Fused input stream: state || action, one DMA per tile.
    sa = jnp.concatenate([state, action], axis=1).astype(jnp.float32)
    if n_pad != n:
        sa = jnp.pad(sa, ((0, n_pad - n), (0, 0)))

    grid = (n_pad // bn,)
    in_dim = state_dim + action_dim

    # Constant-index weight blocks: Pallas keeps them resident in VMEM.
    def wspec(shape):
        return pl.BlockSpec(shape, lambda i: (0, 0))

    q_row = pl.pallas_call(
        critic_kernel,
        out_shape=jax.ShapeDtypeStruct((1, n_pad), jnp.float32),
        grid_spec=pltpu.PrefetchScalarGridSpec(
            num_scalar_prefetch=0,
            grid=grid,
            in_specs=[
                pl.BlockSpec((bn, in_dim), lambda i: (i, 0)),
                wspec(w_in.shape), wspec(b_in.shape),
                wspec(w_s2.shape), wspec(b_s2.shape),
                wspec(w2.shape), wspec(b2.shape),
                wspec(w3.shape), wspec(b3.shape),
            ],
            out_specs=pl.BlockSpec((1, bn), lambda i: (0, i)),
        ),
        compiler_params=pltpu.CompilerParams(
            dimension_semantics=("parallel",)),
    )(sa, w_in, b_in, w_s2, b_s2, w2, b2, w3, b3)

    # lane-dense [1, n_pad] row -> [n, 1] column expected by the module.
    return q_row[0, :n].reshape(n, 1)


def init_params(key, state_dim, action_dim):
    """Deterministic synthetic init mirroring the torch module's layer shapes.
    Hidden-layer weights stored transposed as [in, out]; biases as [1, out];
    fc3 weight kept in torch layout [1, 128]."""
    ks = jax.random.split(key, 10)

    def fanin_uniform(k, fan_in, shape):
        bound = 1.0 / jnp.sqrt(jnp.float32(fan_in))
        return jax.random.uniform(k, shape, jnp.float32, -bound, bound)

    # fcs1: Linear(state_dim, 256)
    w_s1 = fanin_uniform(ks[0], state_dim, (state_dim, 256))
    b_s1 = fanin_uniform(ks[1], state_dim, (1, 256))
    # fcs2: Linear(256, 128)
    w_s2 = fanin_uniform(ks[2], 256, (256, 128))
    b_s2 = fanin_uniform(ks[3], 256, (1, 128))
    # fca1: Linear(action_dim, 128)
    w_a1 = fanin_uniform(ks[4], action_dim, (action_dim, 128))
    b_a1 = fanin_uniform(ks[5], action_dim, (1, 128))
    # fc2: Linear(256, 128), split into the s2-half and the a1-half of the input
    w2 = fanin_uniform(ks[6], 256, (256, 128))
    w2s, w2a = w2[:128, :], w2[128:, :]
    b2 = fanin_uniform(ks[7], 256, (1, 128))
    # fc3: Linear(128, 1), weight uniform(-EPS, EPS), torch layout [out, in] = [1, 128]
    w3 = jax.random.uniform(ks[8], (1, 128), jnp.float32, -EPS, EPS)
    b3 = fanin_uniform(ks[9], 128, (1, 1))

    return (w_s1, b_s1, w_s2, b_s2, w_a1, b_a1, w2s, w2a, b2, w3, b3)


def critic_ref(state, action, params):
    """Pure-JAX f32 reference of the torch forward for verification."""
    (w_s1, b_s1, w_s2, b_s2, w_a1, b_a1, w2s, w2a, b2, w3, b3) = params
    s1 = jax.nn.relu(state @ w_s1 + b_s1)
    s2 = jax.nn.relu(s1 @ w_s2 + b_s2)
    a1 = jax.nn.relu(action @ w_a1 + b_a1)
    x = jnp.concatenate([s2, a1], axis=1)
    w2 = jnp.concatenate([w2s, w2a], axis=0)
    x = jax.nn.relu(x @ w2 + b2)
    return x @ w3.T + b3


if __name__ == "__main__":
    key = jax.random.PRNGKey(0)
    state_dim, action_dim = 32, 16

    k_p, k_s, k_a = jax.random.split(key, 3)
    params = init_params(k_p, state_dim, action_dim)

    # Tolerances account for bf16 matmul operands (f32 accumulation/epilogue).
    ATOL, RTOL = 3e-2, 3e-2

    # Small demo batch -> single-step (bn=128) path.
    n = 16
    state = jax.random.normal(k_s, (n, state_dim), jnp.float32)
    action = jax.random.normal(k_a, (n, action_dim), jnp.float32)
    q = jax.block_until_ready(critic_forward(state, action, params))
    q_ref = critic_ref(state, action, params)
    assert q.shape == (n, 1)
    assert jnp.allclose(q, q_ref, atol=ATOL, rtol=RTOL), "mismatch vs reference (small)"

    # Larger, non-multiple batch -> padded + tiled (>=2 parallel grid steps) path.
    n2 = 600
    k_s2, k_a2 = jax.random.split(jax.random.PRNGKey(1))
    state2 = jax.random.normal(k_s2, (n2, state_dim), jnp.float32)
    action2 = jax.random.normal(k_a2, (n2, action_dim), jnp.float32)
    q2 = jax.block_until_ready(critic_forward(state2, action2, params))
    q2_ref = critic_ref(state2, action2, params)
    assert q2.shape == (n2, 1)
    assert jnp.allclose(q2, q2_ref, atol=ATOL, rtol=RTOL), "mismatch vs reference (tiled)"

    print("KERNEL_OK")
</pallas_src>

<mosaic_0001>
module attributes {stable_mosaic.version = 11 : i64} {
  func.func @critic_kernel(%arg0: i32, %arg1: memref<128x48xf32, #tpu.memory_space<vmem>>, %arg2: memref<48x384xbf16, #tpu.memory_space<vmem>>, %arg3: memref<1x384xf32, #tpu.memory_space<vmem>>, %arg4: memref<256x128xbf16, #tpu.memory_space<vmem>>, %arg5: memref<1x128xf32, #tpu.memory_space<vmem>>, %arg6: memref<256x128xbf16, #tpu.memory_space<vmem>>, %arg7: memref<1x128xf32, #tpu.memory_space<vmem>>, %arg8: memref<1x128xf32, #tpu.memory_space<vmem>>, %arg9: memref<1x1xf32, #tpu.memory_space<vmem>>, %arg10: memref<1x128xf32, #tpu.memory_space<vmem>>) attributes {dimension_semantics = [#tpu.dimension_semantics<parallel>], iteration_bounds = array<i64: 1>, scalar_prefetch = 0 : i64, scratch_operands = 0 : i64, tpu.core_type = #tpu.core_type<tc>, window_params = [{transform_indices = @transform_0, window_bounds = array<i64: 128, 48>}, {pipeline_mode = #tpu.pipeline_mode<synchronous>, transform_indices = @transform_1, window_bounds = array<i64: 48, 384>}, {pipeline_mode = #tpu.pipeline_mode<synchronous>, transform_indices = @transform_2, window_bounds = array<i64: 1, 384>}, {pipeline_mode = #tpu.pipeline_mode<synchronous>, transform_indices = @transform_3, window_bounds = array<i64: 256, 128>}, {pipeline_mode = #tpu.pipeline_mode<synchronous>, transform_indices = @transform_4, window_bounds = array<i64: 1, 128>}, {pipeline_mode = #tpu.pipeline_mode<synchronous>, transform_indices = @transform_5, window_bounds = array<i64: 256, 128>}, {pipeline_mode = #tpu.pipeline_mode<synchronous>, transform_indices = @transform_6, window_bounds = array<i64: 1, 128>}, {pipeline_mode = #tpu.pipeline_mode<synchronous>, transform_indices = @transform_7, window_bounds = array<i64: 1, 128>}, {pipeline_mode = #tpu.pipeline_mode<synchronous>, transform_indices = @transform_8, window_bounds = array<i64: 1, 1>}, {transform_indices = @transform_9, window_bounds = array<i64: 1, 128>}]} {
    %c0 = arith.constant 0 : index
    %c0_0 = arith.constant 0 : index
    %0 = vector.load %arg1[%c0, %c0_0] : memref<128x48xf32, #tpu.memory_space<vmem>>, vector<128x48xf32>
    %1 = arith.truncf %0 : vector<128x48xf32> to vector<128x48xbf16>
    %c0_1 = arith.constant 0 : index
    %c0_2 = arith.constant 0 : index
    %2 = vector.load %arg2[%c0_1, %c0_2] : memref<48x384xbf16, #tpu.memory_space<vmem>>, vector<48x384xbf16>
    %cst = arith.constant dense<0.000000e+00> : vector<128x384xf32>
    %3 = tpu.matmul %1, %2, %cst {dimension_numbers = #tpu.dot_dimension_numbers<[1], [0], [0], [1], [0, 0, 1, 1], [], []>} : vector<128x48xbf16>, vector<48x384xbf16>, vector<128x384xf32> -> vector<128x384xf32>
    %c0_3 = arith.constant 0 : index
    %c0_4 = arith.constant 0 : index
    %4 = vector.load %arg3[%c0_3, %c0_4] : memref<1x384xf32, #tpu.memory_space<vmem>>, vector<1x384xf32>
    %5 = vector.broadcast %4 : vector<1x384xf32> to vector<128x384xf32>
    %6 = arith.addf %3, %5 : vector<128x384xf32>
    %cst_5 = arith.constant 0.000000e+00 : f32
    %7 = vector.broadcast %cst_5 : f32 to vector<128x384xf32>
    %8 = arith.maximumf %6, %7 : vector<128x384xf32>
    %9 = vector.extract_strided_slice %8 {offsets = [0, 0], sizes = [128, 256], strides = [1, 1]} : vector<128x384xf32> to vector<128x256xf32>
    %10 = arith.truncf %9 : vector<128x256xf32> to vector<128x256xbf16>
    %11 = vector.extract_strided_slice %8 {offsets = [0, 256], sizes = [128, 128], strides = [1, 1]} : vector<128x384xf32> to vector<128x128xf32>
    %12 = arith.truncf %11 : vector<128x128xf32> to vector<128x128xbf16>
    %c0_6 = arith.constant 0 : index
    %c0_7 = arith.constant 0 : index
    %13 = vector.load %arg4[%c0_6, %c0_7] : memref<256x128xbf16, #tpu.memory_space<vmem>>, vector<256x128xbf16>
    %cst_8 = arith.constant dense<0.000000e+00> : vector<128x128xf32>
    %14 = tpu.matmul %10, %13, %cst_8 {dimension_numbers = #tpu.dot_dimension_numbers<[1], [0], [0], [1], [0, 0, 1, 1], [], []>} : vector<128x256xbf16>, vector<256x128xbf16>, vector<128x128xf32> -> vector<128x128xf32>
    %c0_9 = arith.constant 0 : index
    %c0_10 = arith.constant 0 : index
    %15 = vector.load %arg5[%c0_9, %c0_10] : memref<1x128xf32, #tpu.memory_space<vmem>>, vector<1x128xf32>
    %16 = vector.broadcast %15 : vector<1x128xf32> to vector<128x128xf32>
    %17 = arith.addf %14, %16 : vector<128x128xf32>
    %cst_11 = arith.constant 0.000000e+00 : f32
    %18 = vector.broadcast %cst_11 : f32 to vector<128x128xf32>
    %19 = arith.maximumf %17, %18 : vector<128x128xf32>
    %20 = arith.truncf %19 : vector<128x128xf32> to vector<128x128xbf16>
    %21 = tpu.concatenate %20, %12 in 1 : vector<128x128xbf16>, vector<128x128xbf16> -> vector<128x256xbf16>
    %c0_12 = arith.constant 0 : index
    %c0_13 = arith.constant 0 : index
    %22 = vector.load %arg6[%c0_12, %c0_13] : memref<256x128xbf16, #tpu.memory_space<vmem>>, vector<256x128xbf16>
    %cst_14 = arith.constant dense<0.000000e+00> : vector<128x128xf32>
    %23 = tpu.matmul %21, %22, %cst_14 {dimension_numbers = #tpu.dot_dimension_numbers<[1], [0], [0], [1], [0, 0, 1, 1], [], []>} : vector<128x256xbf16>, vector<256x128xbf16>, vector<128x128xf32> -> vector<128x128xf32>
    %c0_15 = arith.constant 0 : index
    %c0_16 = arith.constant 0 : index
    %24 = vector.load %arg7[%c0_15, %c0_16] : memref<1x128xf32, #tpu.memory_space<vmem>>, vector<1x128xf32>
    %25 = vector.broadcast %24 : vector<1x128xf32> to vector<128x128xf32>
    %26 = arith.addf %23, %25 : vector<128x128xf32>
    %cst_17 = arith.constant 0.000000e+00 : f32
    %27 = vector.broadcast %cst_17 : f32 to vector<128x128xf32>
    %28 = arith.maximumf %26, %27 : vector<128x128xf32>
    %c0_18 = arith.constant 0 : index
    %c0_19 = arith.constant 0 : index
    %29 = vector.load %arg8[%c0_18, %c0_19] : memref<1x128xf32, #tpu.memory_space<vmem>>, vector<1x128xf32>
    %cst_20 = arith.constant dense<0.000000e+00> : vector<1x128xf32>
    %30 = tpu.matmul %29, %28, %cst_20 {dimension_numbers = #tpu.dot_dimension_numbers<[1], [1], [0], [0], [0, 0, 1, 0], [], []>} : vector<1x128xf32>, vector<128x128xf32>, vector<1x128xf32> -> vector<1x128xf32>
    %c0_21 = arith.constant 0 : index
    %c0_22 = arith.constant 0 : index
    %31 = vector.load %arg9[%c0_21, %c0_22] : memref<1x1xf32, #tpu.memory_space<vmem>>, vector<1x1xf32>
    %32 = vector.broadcast %31 : vector<1x1xf32> to vector<1x128xf32>
    %33 = arith.addf %30, %32 : vector<1x128xf32>
    %c0_23 = arith.constant 0 : index
    %c0_24 = arith.constant 0 : index
    %34 = vector.load %arg10[%c0_23, %c0_24] : memref<1x128xf32, #tpu.memory_space<vmem>>, vector<1x128xf32>
    tpu.vector_store %arg10[%c0_23, %c0_24], %33 {strides = array<i32>} : memref<1x128xf32, #tpu.memory_space<vmem>>, vector<1x128xf32>,
    return
  }
  func.func @transform_0(%arg0: i32) -> (i32, i32) {
    %c0_i32 = arith.constant 0 : i32
    %c0_i32_0 = arith.constant 0 : i32
    return %arg0, %c0_i32 : i32, i32
  }
  func.func @transform_1(%arg0: i32) -> (i32, i32) {
    %c0_i32 = arith.constant 0 : i32
    %c0_i32_0 = arith.constant 0 : i32
    %c0_i32_1 = arith.constant 0 : i32
    return %c0_i32, %c0_i32_0 : i32, i32
  }
  func.func @transform_2(%arg0: i32) -> (i32, i32) {
    %c0_i32 = arith.constant 0 : i32
    %c0_i32_0 = arith.constant 0 : i32
    %c0_i32_1 = arith.constant 0 : i32
    return %c0_i32, %c0_i32_0 : i32, i32
  }
  func.func @transform_3(%arg0: i32) -> (i32, i32) {
    %c0_i32 = arith.constant 0 : i32
    %c0_i32_0 = arith.constant 0 : i32
    %c0_i32_1 = arith.constant 0 : i32
    return %c0_i32, %c0_i32_0 : i32, i32
  }
  func.func @transform_4(%arg0: i32) -> (i32, i32) {
    %c0_i32 = arith.constant 0 : i32
    %c0_i32_0 = arith.constant 0 : i32
    %c0_i32_1 = arith.constant 0 : i32
    return %c0_i32, %c0_i32_0 : i32, i32
  }
  func.func @transform_5(%arg0: i32) -> (i32, i32) {
    %c0_i32 = arith.constant 0 : i32
    %c0_i32_0 = arith.constant 0 : i32
    %c0_i32_1 = arith.constant 0 : i32
    return %c0_i32, %c0_i32_0 : i32, i32
  }
  func.func @transform_6(%arg0: i32) -> (i32, i32) {
    %c0_i32 = arith.constant 0 : i32
    %c0_i32_0 = arith.constant 0 : i32
    %c0_i32_1 = arith.constant 0 : i32
    return %c0_i32, %c0_i32_0 : i32, i32
  }
  func.func @transform_7(%arg0: i32) -> (i32, i32) {
    %c0_i32 = arith.constant 0 : i32
    %c0_i32_0 = arith.constant 0 : i32
    %c0_i32_1 = arith.constant 0 : i32
    return %c0_i32, %c0_i32_0 : i32, i32
  }
  func.func @transform_8(%arg0: i32) -> (i32, i32) {
    %c0_i32 = arith.constant 0 : i32
    %c0_i32_0 = arith.constant 0 : i32
    %c0_i32_1 = arith.constant 0 : i32
    return %c0_i32, %c0_i32_0 : i32, i32
  }
  func.func @transform_9(%arg0: i32) -> (i32, i32) {
    %c0_i32 = arith.constant 0 : i32
    %c0_i32_0 = arith.constant 0 : i32
    return %c0_i32, %arg0 : i32, i32
  }
}

</mosaic_0001>

<llo_original>
// kernel: tpu_custom_call.1
$region0: #{tpu_custom_call.1}
  #allocation0 [shape = 'u32[]', space=smem, size = 0x4, offset = 0x4, fixed_abs, tag = 'smem constant byte address 0x4 - core index']
  #allocation1 [shape = 'u32[72,128]{1,0:T(1,128)}', space=vmem, size = 0x9000, scoped, tag = 'internal scratch']
  #allocation2 [shape = 'f32[1,1]{1,0:T(1,128)S(1)}', space=vmem, size = 0x200, scoped, tag = 'scoped memory for tpu_custom_call.1']
  %s0 = inlined_call_operand.vmem [shape: f32[128,48], index: 0, kind: input, shape index: {}]
  %s1 = inlined_call_operand.hbm [shape: bf16[48,384], index: 1, kind: input, shape index: {}]
  %s2 = inlined_call_operand.vmem [shape: f32[1,384], index: 2, kind: input, shape index: {}]
  %s3 = inlined_call_operand.vmem [shape: bf16[256,128], index: 3, kind: input, shape index: {}]
  %s4 = inlined_call_operand.vmem [shape: f32[1,128], index: 4, kind: input, shape index: {}]
  %s5 = inlined_call_operand.hbm [shape: bf16[256,128], index: 5, kind: input, shape index: {}]
  %s6 = inlined_call_operand.vmem [shape: f32[1,128], index: 6, kind: input, shape index: {}]
  %s7 = inlined_call_operand.vmem [shape: f32[1,128], index: 7, kind: input, shape index: {}]
  %s8 = inlined_call_operand.<no memory space> [shape: f32[1,1], index: 8, kind: input, shape index: {}]
  %s9 = inlined_call_operand.hbm [shape: f32[1,128], index: 9, kind: output, shape index: {}]
  %s10 = sld [smem:[#allocation0]]
  $region54: #{tpu_custom_call.1} parent=0
    _
  %s12 = ssub.s32 1, %s10
  %s13 = scalar_select 0, %s12, %s10
  %v14 = vstv %s8
  %15 = vst [vmem:[#allocation2] sm:$0x1] %v14
  $region1: #{tpu_custom_call.1} parent=0
    #allocation3 [shape = 'u8[36864]{0}', space=vmem, size = 0x9000, scoped, tag = 'input window, operand 1, single buffered']
    #allocation4 [shape = 's32[1]{0}', space=sflag, size = 0x4, scoped, tag = 'scoped memory for tpu_custom_call.1']
    #allocation5 [shape = 's32[1]{0}', space=sflag, size = 0x4, scoped, tag = 'scoped memory for tpu_custom_call.1']
    #allocation6 [shape = 'u8[65536]{0}', space=vmem, size = 0x10000, scoped, tag = 'input window, operand 5, single buffered']
    #allocation7 [shape = 's32[1]{0}', space=sflag, size = 0x4, scoped, tag = 'scoped memory for tpu_custom_call.1']
    #allocation8 [shape = 'u8[512]{0}', space=vmem, size = 0x400, scoped, tag = 'output window, operand 0, single buffered']
    %16 = vsyncpa [#allocation4], 0
    %17 = vsyncpa [#allocation7], 0
    %18 = vsyncpa [#allocation5], 0
    // Predicated region
    $region2: #{tpu_custom_call.1} parent=1 // pred_check
      _
    $region3: #{tpu_custom_call.1} parent=1 // pred_check_branch
      %20 = sbr.rel (0) target = $region5
    $region4: #{tpu_custom_call.1} parent=1 // pred_region
      _
    $region5: #{tpu_custom_call.1} parent=1 // pred_fallthru
      _
    // Predicated region
    $region6: #{tpu_custom_call.1} parent=1 // pred_check
      _
    $region7: #{tpu_custom_call.1} parent=1 // pred_check_branch
      %22 = sbr.rel (0) target = $region9
    $region8: #{tpu_custom_call.1} parent=1 // pred_region
      %24 = vsyncadd [#allocation4], 0
      %s25 = sshll.u32 %s1, 4
      %s26 = int_to_ptr.hbm [resolvable:$true] %s25
      %s27 = sshll.u32 [#allocation3], 4
      %s28 = int_to_ptr.vmem [resolvable:$true] %s27
      %33 = dma.hbm_to_vmem [thread:$0]  %s26, 1152, %s28, [#allocation4], 192, 192, 12
    $region9: #{tpu_custom_call.1} parent=1 // pred_fallthru
      _
    // Predicated region
    $region10: #{tpu_custom_call.1} parent=1 // pred_check
      _
    $region11: #{tpu_custom_call.1} parent=1 // pred_check_branch
      %35 = sbr.rel (0) target = $region13
    $region12: #{tpu_custom_call.1} parent=1 // pred_region
      _
    $region13: #{tpu_custom_call.1} parent=1 // pred_fallthru
      _
    // Predicated region
    $region14: #{tpu_custom_call.1} parent=1 // pred_check
      _
    $region15: #{tpu_custom_call.1} parent=1 // pred_check_branch
      %37 = sbr.rel (0) target = $region17
    $region16: #{tpu_custom_call.1} parent=1 // pred_region
      _
    $region17: #{tpu_custom_call.1} parent=1 // pred_fallthru
      _
    // Predicated region
    $region18: #{tpu_custom_call.1} parent=1 // pred_check
      _
    $region19: #{tpu_custom_call.1} parent=1 // pred_check_branch
      %39 = sbr.rel (0) target = $region21
    $region20: #{tpu_custom_call.1} parent=1 // pred_region
      _
    $region21: #{tpu_custom_call.1} parent=1 // pred_fallthru
      _
    // Predicated region
    $region22: #{tpu_custom_call.1} parent=1 // pred_check
      _
    $region23: #{tpu_custom_call.1} parent=1 // pred_check_branch
      %41 = sbr.rel (0) target = $region25
    $region24: #{tpu_custom_call.1} parent=1 // pred_region
      %43 = vsyncadd [#allocation7], 0
      %s44 = sshll.u32 %s5, 4
      %s45 = int_to_ptr.hbm [resolvable:$true] %s44
      %s46 = sshll.u32 [#allocation6], 4
      %s47 = int_to_ptr.vmem [resolvable:$true] %s46
      %52 = dma.hbm_to_vmem [thread:$0]  %s45, 2048, %s47, [#allocation7], 64, 64, 4
    $region25: #{tpu_custom_call.1} parent=1 // pred_fallthru
      _
    // Predicated region
    $region26: #{tpu_custom_call.1} parent=1 // pred_check
      _
    $region27: #{tpu_custom_call.1} parent=1 // pred_check_branch
      %54 = sbr.rel (0) target = $region29
    $region28: #{tpu_custom_call.1} parent=1 // pred_region
      _
    $region29: #{tpu_custom_call.1} parent=1 // pred_fallthru
      _
    // Predicated region
    $region30: #{tpu_custom_call.1} parent=1 // pred_check
      _
    $region31: #{tpu_custom_call.1} parent=1 // pred_check_branch
      %56 = sbr.rel (0) target = $region33
    $region32: #{tpu_custom_call.1} parent=1 // pred_region
      _
    $region33: #{tpu_custom_call.1} parent=1 // pred_fallthru
      _
    // Predicated region
    $region34: #{tpu_custom_call.1} parent=1 // pred_check
      _
    $region35: #{tpu_custom_call.1} parent=1 // pred_check_branch
      %58 = sbr.rel (0) target = $region37
    $region36: #{tpu_custom_call.1} parent=1 // pred_region
      _
    $region37: #{tpu_custom_call.1} parent=1 // pred_fallthru
      _
    // Predicated region
    $region38: #{tpu_custom_call.1} parent=1 // pred_check
      _
    $region39: #{tpu_custom_call.1} parent=1 // pred_check_branch
      %60 = sbr.rel (0) target = $region41
    $region40: #{tpu_custom_call.1} parent=1 // pred_region
      %62 = dma.done [#allocation4], 1152
    $region41: #{tpu_custom_call.1} parent=1 // pred_fallthru
      _
    // Predicated region
    $region42: #{tpu_custom_call.1} parent=1 // pred_check
      _
    $region43: #{tpu_custom_call.1} parent=1 // pred_check_branch
      %64 = sbr.rel (0) target = $region45
    $region44: #{tpu_custom_call.1} parent=1 // pred_region
      %66 = dma.done [#allocation7], 2048
    $region45: #{tpu_custom_call.1} parent=1 // pred_fallthru
      _
    %v68 = vld [vmem:[%s0] sm:$0xff]
    %v69 = vld [vmem:[%s0 + $0x8] sm:$0xff]
    %v70 = vld [vmem:[%s0 + $0x10] sm:$0xff]
    %v71 = vld [vmem:[%s0 + $0x18] sm:$0xff]
    %v72 = vld [vmem:[%s0 + $0x20] sm:$0xff]
    %v73 = vld [vmem:[%s0 + $0x28] sm:$0xff]
    %v74 = vld [vmem:[%s0 + $0x30] sm:$0xff]
    %v75 = vld [vmem:[%s0 + $0x38] sm:$0xff]
    %v76 = vld [vmem:[%s0 + $0x40] sm:$0xff]
    %v77 = vld [vmem:[%s0 + $0x48] sm:$0xff]
    %v78 = vld [vmem:[%s0 + $0x50] sm:$0xff]
    %v79 = vld [vmem:[%s0 + $0x58] sm:$0xff]
    %v80 = vld [vmem:[%s0 + $0x60] sm:$0xff]
    %v81 = vld [vmem:[%s0 + $0x68] sm:$0xff]
    %v82 = vld [vmem:[%s0 + $0x70] sm:$0xff]
    %v83 = vld [vmem:[%s0 + $0x78] sm:$0xff]
    %v84 = vpack.c.bf16 %v69, %v68
    %v85 = vpack.c.bf16 %v71, %v70
    %v86 = vpack.c.bf16 %v73, %v72
    %v87 = vpack.c.bf16 %v75, %v74
    %v88 = vpack.c.bf16 %v77, %v76
    %v89 = vpack.c.bf16 %v79, %v78
    %v90 = vpack.c.bf16 %v81, %v80
    %v91 = vpack.c.bf16 %v83, %v82
    %v92 = vld [vmem:[#allocation3] sm:$0xff]
    %v93 = vld [vmem:[#allocation3 + $0x8] sm:$0xf]
    %v94 = vld [vmem:[#allocation3 + $0xc] sm:$0xff]
    %v95 = vld [vmem:[#allocation3 + $0x14] sm:$0xf]
    %v96 = vld [vmem:[#allocation3 + $0x18] sm:$0xff]
    %v97 = vld [vmem:[#allocation3 + $0x20] sm:$0xf]
    %v98 = vld [vmem:[#allocation3 + $0x24] sm:$0xff]
    %v99 = vld [vmem:[#allocation3 + $0x2c] sm:$0xf]
    %v100 = vld [vmem:[#allocation3 + $0x30] sm:$0xff]
    %v101 = vld [vmem:[#allocation3 + $0x38] sm:$0xf]
    %v102 = vld [vmem:[#allocation3 + $0x3c] sm:$0xff]
    %v103 = vld [vmem:[#allocation3 + $0x44] sm:$0xf]
    %v104 = vld [vmem:[%s2] sm:$0x7]
    %v106 = vperm.slane %v104, 0
    %v107 = vperm.slane %v104, 1
    %v108 = vperm.slane %v104, 2
    %v124 = vunpack.c.l.b16 %v92
    %v125 = vunpack.c.h.b16 %v92
    %v126 = vunpack.c.l.b16 %v93
    %v127 = vunpack.c.l.b16 %v94
    %v128 = vunpack.c.h.b16 %v94
    %v129 = vunpack.c.l.b16 %v95
    %v130 = vunpack.c.l.b16 %v96
    %v131 = vunpack.c.h.b16 %v96
    %v132 = vunpack.c.l.b16 %v97
    %v133 = vunpack.c.l.b16 %v98
    %v134 = vunpack.c.h.b16 %v98
    %v135 = vunpack.c.l.b16 %v99
    %v136 = vunpack.c.l.b16 %v100
    %v137 = vunpack.c.h.b16 %v100
    %v138 = vunpack.c.l.b16 %v101
    %v139 = vunpack.c.l.b16 %v102
    %v140 = vunpack.c.h.b16 %v102
    %v141 = vunpack.c.l.b16 %v103
    %v142 = vpack.c.b16 %v127, %v124
    %v143 = vpack.c.b16 %v128, %v125
    %v144 = vpack.c.b16 %v129, %v126
    %v145 = vpack.c.b16 %v133, %v130
    %v146 = vpack.c.b16 %v134, %v131
    %v147 = vpack.c.b16 %v135, %v132
    %v148 = vpack.c.b16 %v139, %v136
    %v149 = vpack.c.b16 %v140, %v137
    %v150 = vpack.c.b16 %v141, %v138
    %vm160 = vcmask 392192
    %v162 = vsel %vm160, %v84, 0
    %v165 = vsel %vm160, %v85, 0
    %v168 = vsel %vm160, %v86, 0
    %v171 = vsel %vm160, %v87, 0
    %v174 = vsel %vm160, %v88, 0
    %v177 = vsel %vm160, %v89, 0
    %v180 = vsel %vm160, %v90, 0
    %v183 = vsel %vm160, %v91, 0
    %185 = vmatpush.bf16.msra.mxu0 0
    %186 = vmatpush.bf16.msra.mxu0 0
    %187 = vmatpush.bf16.msra.mxu0 0
    %188 = vmatpush.bf16.msra.mxu0 0
    %189 = vmatpush.bf16.msra.mxu0 0
    %190 = vmatpush.bf16.msra.mxu0 %v148
    %191 = vmatpush.bf16.msra.mxu0 %v145
    %192 = vmatpush.bf16.msra.mxu0 %v142
    %193 = vmatmul.bf16.gmra.mxu0 %v162
    %v194 = vpop.f32.mrf.mxu0
    %v195 = vadd.f32 %v106, %v194
    %v196 = vpop.f32.mrf.mxu0
    %v197 = vadd.f32 %v106, %v196
    %198 = vmatmul.bf16.gmra.mxu0 %v165
    %v199 = vpop.f32.mrf.mxu0
    %v200 = vadd.f32 %v106, %v199
    %v201 = vpop.f32.mrf.mxu0
    %v202 = vadd.f32 %v106, %v201
    %203 = vmatmul.bf16.gmra.mxu0 %v168
    %v204 = vpop.f32.mrf.mxu0
    %v205 = vadd.f32 %v106, %v204
    %v206 = vpop.f32.mrf.mxu0
    %v207 = vadd.f32 %v106, %v206
    %208 = vmatmul.bf16.gmra.mxu0 %v171
    %v209 = vpop.f32.mrf.mxu0
    %v210 = vadd.f32 %v106, %v209
    %v211 = vpop.f32.mrf.mxu0
    %v212 = vadd.f32 %v106, %v211
    %213 = vmatmul.bf16.gmra.mxu0 %v174
    %v214 = vpop.f32.mrf.mxu0
    %v215 = vadd.f32 %v106, %v214
    %v216 = vpop.f32.mrf.mxu0
    %v217 = vadd.f32 %v106, %v216
    %218 = vmatmul.bf16.gmra.mxu0 %v177
    %v219 = vpop.f32.mrf.mxu0
    %v220 = vadd.f32 %v106, %v219
    %v221 = vpop.f32.mrf.mxu0
    %v222 = vadd.f32 %v106, %v221
    %223 = vmatmul.bf16.gmra.mxu0 %v180
    %v224 = vpop.f32.mrf.mxu0
    %v225 = vadd.f32 %v106, %v224
    %v226 = vpop.f32.mrf.mxu0
    %v227 = vadd.f32 %v106, %v226
    %228 = vmatmul.bf16.gmra.mxu0 %v183
    %v229 = vpop.f32.mrf.mxu0
    %v230 = vadd.f32 %v106, %v229
    %v231 = vpop.f32.mrf.mxu0
    %v232 = vadd.f32 %v106, %v231
    %233 = vdwg.mxu0
    %234 = vmatpush.bf16.msra.mxu0 0
    %235 = vmatpush.bf16.msra.mxu0 0
    %236 = vmatpush.bf16.msra.mxu0 0
    %237 = vmatpush.bf16.msra.mxu0 0
    %238 = vmatpush.bf16.msra.mxu0 0
    %239 = vmatpush.bf16.msra.mxu0 %v149
    %240 = vmatpush.bf16.msra.mxu0 %v146
    %241 = vmatpush.bf16.msra.mxu0 %v143
    %242 = vmatmul.bf16.gmra.mxu0 %v162
    %v243 = vpop.f32.mrf.mxu0
    %v244 = vadd.f32 %v107, %v243
    %v245 = vpop.f32.mrf.mxu0
    %v246 = vadd.f32 %v107, %v245
    %247 = vmatmul.bf16.gmra.mxu0 %v165
    %v248 = vpop.f32.mrf.mxu0
    %v249 = vadd.f32 %v107, %v248
    %v250 = vpop.f32.mrf.mxu0
    %v251 = vadd.f32 %v107, %v250
    %252 = vmatmul.bf16.gmra.mxu0 %v168
    %v253 = vpop.f32.mrf.mxu0
    %v254 = vadd.f32 %v107, %v253
    %v255 = vpop.f32.mrf.mxu0
    %v256 = vadd.f32 %v107, %v255
    %257 = vmatmul.bf16.gmra.mxu0 %v171
    %v258 = vpop.f32.mrf.mxu0
    %v259 = vadd.f32 %v107, %v258
    %v260 = vpop.f32.mrf.mxu0
    %v261 = vadd.f32 %v107, %v260
    %262 = vmatmul.bf16.gmra.mxu0 %v174
    %v263 = vpop.f32.mrf.mxu0
    %v264 = vadd.f32 %v107, %v263
    %v265 = vpop.f32.mrf.mxu0
    %v266 = vadd.f32 %v107, %v265
    %267 = vmatmul.bf16.gmra.mxu0 %v177
    %v268 = vpop.f32.mrf.mxu0
    %v269 = vadd.f32 %v107, %v268
    %v270 = vpop.f32.mrf.mxu0
    %v271 = vadd.f32 %v107, %v270
    %272 = vmatmul.bf16.gmra.mxu0 %v180
    %v273 = vpop.f32.mrf.mxu0
    %v274 = vadd.f32 %v107, %v273
    %v275 = vpop.f32.mrf.mxu0
    %v276 = vadd.f32 %v107, %v275
    %277 = vmatmul.bf16.gmra.mxu0 %v183
    %v278 = vpop.f32.mrf.mxu0
    %v279 = vadd.f32 %v107, %v278
    %v280 = vpop.f32.mrf.mxu0
    %v281 = vadd.f32 %v107, %v280
    %282 = vdwg.mxu0
    %283 = vmatpush.bf16.msra.mxu0 0
    %284 = vmatpush.bf16.msra.mxu0 0
    %285 = vmatpush.bf16.msra.mxu0 0
    %286 = vmatpush.bf16.msra.mxu0 0
    %287 = vmatpush.bf16.msra.mxu0 0
    %288 = vmatpush.bf16.msra.mxu0 %v150
    %289 = vmatpush.bf16.msra.mxu0 %v147
    %290 = vmatpush.bf16.msra.mxu0 %v144
    %291 = vmatmul.bf16.gmra.mxu0 %v162
    %v292 = vpop.f32.mrf.mxu0
    %v293 = vadd.f32 %v108, %v292
    %v294 = vpop.f32.mrf.mxu0
    %v295 = vadd.f32 %v108, %v294
    %296 = vmatmul.bf16.gmra.mxu0 %v165
    %v297 = vpop.f32.mrf.mxu0
    %v298 = vadd.f32 %v108, %v297
    %v299 = vpop.f32.mrf.mxu0
    %v300 = vadd.f32 %v108, %v299
    %301 = vmatmul.bf16.gmra.mxu0 %v168
    %v302 = vpop.f32.mrf.mxu0
    %v303 = vadd.f32 %v108, %v302
    %v304 = vpop.f32.mrf.mxu0
    %v305 = vadd.f32 %v108, %v304
    %306 = vmatmul.bf16.gmra.mxu0 %v171
    %v307 = vpop.f32.mrf.mxu0
    %v308 = vadd.f32 %v108, %v307
    %v309 = vpop.f32.mrf.mxu0
    %v310 = vadd.f32 %v108, %v309
    %311 = vmatmul.bf16.gmra.mxu0 %v174
    %v312 = vpop.f32.mrf.mxu0
    %v313 = vadd.f32 %v108, %v312
    %v314 = vpop.f32.mrf.mxu0
    %v315 = vadd.f32 %v108, %v314
    %316 = vmatmul.bf16.gmra.mxu0 %v177
    %v317 = vpop.f32.mrf.mxu0
    %v318 = vadd.f32 %v108, %v317
    %v319 = vpop.f32.mrf.mxu0
    %v320 = vadd.f32 %v108, %v319
    %321 = vmatmul.bf16.gmra.mxu0 %v180
    %v322 = vpop.f32.mrf.mxu0
    %v323 = vadd.f32 %v108, %v322
    %v324 = vpop.f32.mrf.mxu0
    %v325 = vadd.f32 %v108, %v324
    %326 = vmatmul.bf16.gmra.mxu0 %v183
    %v327 = vpop.f32.mrf.mxu0
    %v328 = vadd.f32 %v108, %v327
    %v329 = vpop.f32.mrf.mxu0
    %v330 = vadd.f32 %v108, %v329
    %331 = vdwg.mxu0
    %v332 = vmax.f32 %v195, 0.0
    %v333 = vmax.f32 %v244, 0.0
    %v334 = vmax.f32 %v293, 0.0
    %v335 = vmax.f32 %v197, 0.0
    %v336 = vmax.f32 %v246, 0.0
    %v337 = vmax.f32 %v295, 0.0
    %v338 = vmax.f32 %v200, 0.0
    %v339 = vmax.f32 %v249, 0.0
    %v340 = vmax.f32 %v298, 0.0
    %v341 = vmax.f32 %v202, 0.0
    %v342 = vmax.f32 %v251, 0.0
    %v343 = vmax.f32 %v300, 0.0
    %v344 = vmax.f32 %v205, 0.0
    %v345 = vmax.f32 %v254, 0.0
    %v346 = vmax.f32 %v303, 0.0
    %v347 = vmax.f32 %v207, 0.0
    %v348 = vmax.f32 %v256, 0.0
    %v349 = vmax.f32 %v305, 0.0
    %v350 = vmax.f32 %v210, 0.0
    %v351 = vmax.f32 %v259, 0.0
    %v352 = vmax.f32 %v308, 0.0
    %v353 = vmax.f32 %v212, 0.0
    %v354 = vmax.f32 %v261, 0.0
    %v355 = vmax.f32 %v310, 0.0
    %v356 = vmax.f32 %v215, 0.0
    %v357 = vmax.f32 %v264, 0.0
    %v358 = vmax.f32 %v313, 0.0
    %v359 = vmax.f32 %v217, 0.0
    %v360 = vmax.f32 %v266, 0.0
    %v361 = vmax.f32 %v315, 0.0
    %v362 = vmax.f32 %v220, 0.0
    %v363 = vmax.f32 %v269, 0.0
    %v364 = vmax.f32 %v318, 0.0
    %v365 = vmax.f32 %v222, 0.0
    %v366 = vmax.f32 %v271, 0.0
    %v367 = vmax.f32 %v320, 0.0
    %v368 = vmax.f32 %v225, 0.0
    %v369 = vmax.f32 %v274, 0.0
    %v370 = vmax.f32 %v323, 0.0
    %v371 = vmax.f32 %v227, 0.0
    %v372 = vmax.f32 %v276, 0.0
    %v373 = vmax.f32 %v325, 0.0
    %v374 = vmax.f32 %v230, 0.0
    %v375 = vmax.f32 %v279, 0.0
    %v376 = vmax.f32 %v328, 0.0
    %v377 = vmax.f32 %v232, 0.0
    %v378 = vmax.f32 %v281, 0.0
    %v379 = vmax.f32 %v330, 0.0
    %v380 = vpack.c.bf16 %v335, %v332
    %v381 = vpack.c.bf16 %v336, %v333
    %v382 = vpack.c.bf16 %v341, %v338
    %v383 = vpack.c.bf16 %v342, %v339
    %v384 = vpack.c.bf16 %v347, %v344
    %v385 = vpack.c.bf16 %v348, %v345
    %v386 = vpack.c.bf16 %v353, %v350
    %v387 = vpack.c.bf16 %v354, %v351
    %v388 = vpack.c.bf16 %v359, %v356
    %v389 = vpack.c.bf16 %v360, %v357
    %v390 = vpack.c.bf16 %v365, %v362
    %v391 = vpack.c.bf16 %v366, %v363
    %v392 = vpack.c.bf16 %v371, %v368
    %v393 = vpack.c.bf16 %v372, %v369
    %v394 = vpack.c.bf16 %v377, %v374
    %v395 = vpack.c.bf16 %v378, %v375
    %v396 = vpack.c.bf16 %v334, %v334
    %v397 = vpack.c.bf16 %v337, %v337
    %v398 = vpack.c.bf16 %v340, %v340
    %v399 = vpack.c.bf16 %v343, %v343
    %v400 = vpack.c.bf16 %v346, %v346
    %v401 = vpack.c.bf16 %v349, %v349
    %v402 = vpack.c.bf16 %v352, %v352
    %v403 = vpack.c.bf16 %v355, %v355
    %v404 = vpack.c.bf16 %v358, %v358
    %v405 = vpack.c.bf16 %v361, %v361
    %v406 = vpack.c.bf16 %v364, %v364
    %v407 = vpack.c.bf16 %v367, %v367
    %v408 = vpack.c.bf16 %v370, %v370
    %v409 = vpack.c.bf16 %v373, %v373
    %v410 = vpack.c.bf16 %v376, %v376
    %v411 = vpack.c.bf16 %v379, %v379
    %v412 = vld [vmem:[%s3] sm:$0xf]
    %v413 = vld [vmem:[%s3 + $0x4] sm:$0xf]
    %v414 = vld [vmem:[%s3 + $0x8] sm:$0xf]
    %v415 = vld [vmem:[%s3 + $0xc] sm:$0xf]
    %v416 = vld [vmem:[%s3 + $0x10] sm:$0xf]
    %v417 = vld [vmem:[%s3 + $0x14] sm:$0xf]
    %v418 = vld [vmem:[%s3 + $0x18] sm:$0xf]
    %v419 = vld [vmem:[%s3 + $0x1c] sm:$0xf]
    %v420 = vld [vmem:[%s3 + $0x20] sm:$0xf]
    %v421 = vld [vmem:[%s3 + $0x24] sm:$0xf]
    %v422 = vld [vmem:[%s3 + $0x28] sm:$0xf]
    %v423 = vld [vmem:[%s3 + $0x2c] sm:$0xf]
    %v424 = vld [vmem:[%s3 + $0x30] sm:$0xf]
    %v425 = vld [vmem:[%s3 + $0x34] sm:$0xf]
    %v426 = vld [vmem:[%s3 + $0x38] sm:$0xf]
    %v427 = vld [vmem:[%s3 + $0x3c] sm:$0xf]
    %v428 = vld [vmem:[%s3 + $0x40] sm:$0xf]
    %v429 = vld [vmem:[%s3 + $0x44] sm:$0xf]
    %v430 = vld [vmem:[%s3 + $0x48] sm:$0xf]
    %v431 = vld [vmem:[%s3 + $0x4c] sm:$0xf]
    %v432 = vld [vmem:[%s3 + $0x50] sm:$0xf]
    %v433 = vld [vmem:[%s3 + $0x54] sm:$0xf]
    %v434 = vld [vmem:[%s3 + $0x58] sm:$0xf]
    %v435 = vld [vmem:[%s3 + $0x5c] sm:$0xf]
    %v436 = vld [vmem:[%s3 + $0x60] sm:$0xf]
    %v437 = vld [vmem:[%s3 + $0x64] sm:$0xf]
    %v438 = vld [vmem:[%s3 + $0x68] sm:$0xf]
    %v439 = vld [vmem:[%s3 + $0x6c] sm:$0xf]
    %v440 = vld [vmem:[%s3 + $0x70] sm:$0xf]
    %v441 = vld [vmem:[%s3 + $0x74] sm:$0xf]
    %v442 = vld [vmem:[%s3 + $0x78] sm:$0xf]
    %v443 = vld [vmem:[%s3 + $0x7c] sm:$0xf]
    %v444 = vld [vmem:[%s4] sm:$0x1]
    %v446 = vperm.slane %v444, 0
    %v480 = vunpack.c.l.b16 %v412
    %v481 = vunpack.c.l.b16 %v413
    %v482 = vunpack.c.l.b16 %v414
    %v483 = vunpack.c.l.b16 %v415
    %v484 = vunpack.c.l.b16 %v416
    %v485 = vunpack.c.l.b16 %v417
    %v486 = vunpack.c.l.b16 %v418
    %v487 = vunpack.c.l.b16 %v419
    %v488 = vunpack.c.l.b16 %v420
    %v489 = vunpack.c.l.b16 %v421
    %v490 = vunpack.c.l.b16 %v422
    %v491 = vunpack.c.l.b16 %v423
    %v492 = vunpack.c.l.b16 %v424
    %v493 = vunpack.c.l.b16 %v425
    %v494 = vunpack.c.l.b16 %v426
    %v495 = vunpack.c.l.b16 %v427
    %v496 = vunpack.c.l.b16 %v428
    %v497 = vunpack.c.l.b16 %v429
    %v498 = vunpack.c.l.b16 %v430
    %v499 = vunpack.c.l.b16 %v431
    %v500 = vunpack.c.l.b16 %v432
    %v501 = vunpack.c.l.b16 %v433
    %v502 = vunpack.c.l.b16 %v434
    %v503 = vunpack.c.l.b16 %v435
    %v504 = vunpack.c.l.b16 %v436
    %v505 = vunpack.c.l.b16 %v437
    %v506 = vunpack.c.l.b16 %v438
    %v507 = vunpack.c.l.b16 %v439
    %v508 = vunpack.c.l.b16 %v440
    %v509 = vunpack.c.l.b16 %v441
    %v510 = vunpack.c.l.b16 %v442
    %v511 = vunpack.c.l.b16 %v443
    %v512 = vpack.c.b16 %v481, %v480
    %v513 = vpack.c.b16 %v483, %v482
    %v514 = vpack.c.b16 %v485, %v484
    %v515 = vpack.c.b16 %v487, %v486
    %v516 = vpack.c.b16 %v489, %v488
    %v517 = vpack.c.b16 %v491, %v490
    %v518 = vpack.c.b16 %v493, %v492
    %v519 = vpack.c.b16 %v495, %v494
    %v520 = vpack.c.b16 %v497, %v496
    %v521 = vpack.c.b16 %v499, %v498
    %v522 = vpack.c.b16 %v501, %v500
    %v523 = vpack.c.b16 %v503, %v502
    %v524 = vpack.c.b16 %v505, %v504
    %v525 = vpack.c.b16 %v507, %v506
    %v526 = vpack.c.b16 %v509, %v508
    %v527 = vpack.c.b16 %v511, %v510
    %544 = vmatpush.bf16.msra.mxu0 %v519
    %545 = vmatpush.bf16.msra.mxu0 %v518
    %546 = vmatpush.bf16.msra.mxu0 %v517
    %547 = vmatpush.bf16.msra.mxu0 %v516
    %548 = vmatpush.bf16.msra.mxu0 %v515
    %549 = vmatpush.bf16.msra.mxu0 %v514
    %550 = vmatpush.bf16.msra.mxu0 %v513
    %551 = vmatpush.bf16.msra.mxu0 %v512
    %552 = vmatmul.bf16.gmra.mxu0 %v380
    %v553 = vpop.f32.mrf.mxu0
    %v554 = vadd.f32 %v446, %v553
    %v555 = vpop.f32.mrf.mxu0
    %v556 = vadd.f32 %v446, %v555
    %557 = vmatmul.bf16.gmra.mxu0 %v382
    %v558 = vpop.f32.mrf.mxu0
    %v559 = vadd.f32 %v446, %v558
    %v560 = vpop.f32.mrf.mxu0
    %v561 = vadd.f32 %v446, %v560
    %562 = vmatmul.bf16.gmra.mxu0 %v384
    %v563 = vpop.f32.mrf.mxu0
    %v564 = vadd.f32 %v446, %v563
    %v565 = vpop.f32.mrf.mxu0
    %v566 = vadd.f32 %v446, %v565
    %567 = vmatmul.bf16.gmra.mxu0 %v386
    %v568 = vpop.f32.mrf.mxu0
    %v569 = vadd.f32 %v446, %v568
    %v570 = vpop.f32.mrf.mxu0
    %v571 = vadd.f32 %v446, %v570
    %572 = vmatmul.bf16.gmra.mxu0 %v388
    %v573 = vpop.f32.mrf.mxu0
    %v574 = vadd.f32 %v446, %v573
    %v575 = vpop.f32.mrf.mxu0
    %v576 = vadd.f32 %v446, %v575
    %577 = vmatmul.bf16.gmra.mxu0 %v390
    %v578 = vpop.f32.mrf.mxu0
    %v579 = vadd.f32 %v446, %v578
    %v580 = vpop.f32.mrf.mxu0
    %v581 = vadd.f32 %v446, %v580
    %582 = vmatmul.bf16.gmra.mxu0 %v392
    %v583 = vpop.f32.mrf.mxu0
    %v584 = vadd.f32 %v446, %v583
    %v585 = vpop.f32.mrf.mxu0
    %v586 = vadd.f32 %v446, %v585
    %587 = vmatmul.bf16.gmra.mxu0 %v394
    %v588 = vpop.f32.mrf.mxu0
    %v589 = vadd.f32 %v446, %v588
    %v590 = vpop.f32.mrf.mxu0
    %v591 = vadd.f32 %v446, %v590
    %592 = vdwg.mxu0
    %593 = vmatpush.bf16.msra.mxu0 %v527
    %594 = vmatpush.bf16.msra.mxu0 %v526
    %595 = vmatpush.bf16.msra.mxu0 %v525
    %596 = vmatpush.bf16.msra.mxu0 %v524
    %597 = vmatpush.bf16.msra.mxu0 %v523
    %598 = vmatpush.bf16.msra.mxu0 %v522
    %599 = vmatpush.bf16.msra.mxu0 %v521
    %600 = vmatpush.bf16.msra.mxu0 %v520
    %601 = vmatmul.bf16.gmra.mxu0 %v381
    %v602 = vpop.f32.mrf.mxu0
    %v603 = vadd.f32 %v554, %v602
    %v604 = vpop.f32.mrf.mxu0
    %v605 = vadd.f32 %v556, %v604
    %606 = vmatmul.bf16.gmra.mxu0 %v383
    %v607 = vpop.f32.mrf.mxu0
    %v608 = vadd.f32 %v559, %v607
    %v609 = vpop.f32.mrf.mxu0
    %v610 = vadd.f32 %v561, %v609
    %611 = vmatmul.bf16.gmra.mxu0 %v385
    %v612 = vpop.f32.mrf.mxu0
    %v613 = vadd.f32 %v564, %v612
    %v614 = vpop.f32.mrf.mxu0
    %v615 = vadd.f32 %v566, %v614
    %616 = vmatmul.bf16.gmra.mxu0 %v387
    %v617 = vpop.f32.mrf.mxu0
    %v618 = vadd.f32 %v569, %v617
    %v619 = vpop.f32.mrf.mxu0
    %v620 = vadd.f32 %v571, %v619
    %621 = vmatmul.bf16.gmra.mxu0 %v389
    %v622 = vpop.f32.mrf.mxu0
    %v623 = vadd.f32 %v574, %v622
    %v624 = vpop.f32.mrf.mxu0
    %v625 = vadd.f32 %v576, %v624
    %626 = vmatmul.bf16.gmra.mxu0 %v391
    %v627 = vpop.f32.mrf.mxu0
    %v628 = vadd.f32 %v579, %v627
    %v629 = vpop.f32.mrf.mxu0
    %v630 = vadd.f32 %v581, %v629
    %631 = vmatmul.bf16.gmra.mxu0 %v393
    %v632 = vpop.f32.mrf.mxu0
    %v633 = vadd.f32 %v584, %v632
    %v634 = vpop.f32.mrf.mxu0
    %v635 = vadd.f32 %v586, %v634
    %636 = vmatmul.bf16.gmra.mxu0 %v395
    %v637 = vpop.f32.mrf.mxu0
    %v638 = vadd.f32 %v589, %v637
    %v639 = vpop.f32.mrf.mxu0
    %v640 = vadd.f32 %v591, %v639
    %641 = vdwg.mxu0
    %v642 = vmax.f32 %v603, 0.0
    %v643 = vmax.f32 %v605, 0.0
    %v644 = vmax.f32 %v608, 0.0
    %v645 = vmax.f32 %v610, 0.0
    %v646 = vmax.f32 %v613, 0.0
    %v647 = vmax.f32 %v615, 0.0
    %v648 = vmax.f32 %v618, 0.0
    %v649 = vmax.f32 %v620, 0.0
    %v650 = vmax.f32 %v623, 0.0
    %v651 = vmax.f32 %v625, 0.0
    %v652 = vmax.f32 %v628, 0.0
    %v653 = vmax.f32 %v630, 0.0
    %v654 = vmax.f32 %v633, 0.0
    %v655 = vmax.f32 %v635, 0.0
    %v656 = vmax.f32 %v638, 0.0
    %v657 = vmax.f32 %v640, 0.0
    %v658 = vpack.c.bf16 %v642, %v642
    %v659 = vpack.c.bf16 %v643, %v643
    %v660 = vpack.c.bf16 %v644, %v644
    %v661 = vpack.c.bf16 %v645, %v645
    %v662 = vpack.c.bf16 %v646, %v646
    %v663 = vpack.c.bf16 %v647, %v647
    %v664 = vpack.c.bf16 %v648, %v648
    %v665 = vpack.c.bf16 %v649, %v649
    %v666 = vpack.c.bf16 %v650, %v650
    %v667 = vpack.c.bf16 %v651, %v651
    %v668 = vpack.c.bf16 %v652, %v652
    %v669 = vpack.c.bf16 %v653, %v653
    %v670 = vpack.c.bf16 %v654, %v654
    %v671 = vpack.c.bf16 %v655, %v655
    %v672 = vpack.c.bf16 %v656, %v656
    %v673 = vpack.c.bf16 %v657, %v657
    %v690 = vunpack.c.l.b16 %v658
    %v691 = vunpack.c.l.b16 %v659
    %v692 = vunpack.c.l.b16 %v660
    %v693 = vunpack.c.l.b16 %v661
    %v694 = vunpack.c.l.b16 %v662
    %v695 = vunpack.c.l.b16 %v663
    %v696 = vunpack.c.l.b16 %v664
    %v697 = vunpack.c.l.b16 %v665
    %v698 = vunpack.c.l.b16 %v666
    %v699 = vunpack.c.l.b16 %v667
    %v700 = vunpack.c.l.b16 %v668
    %v701 = vunpack.c.l.b16 %v669
    %v702 = vunpack.c.l.b16 %v670
    %v703 = vunpack.c.l.b16 %v671
    %v704 = vunpack.c.l.b16 %v672
    %v705 = vunpack.c.l.b16 %v673
    %v706 = vpack.c.b16 %v691, %v690
    %v707 = vpack.c.b16 %v693, %v692
    %v708 = vpack.c.b16 %v695, %v694
    %v709 = vpack.c.b16 %v697, %v696
    %v710 = vpack.c.b16 %v699, %v698
    %v711 = vpack.c.b16 %v701, %v700
    %v712 = vpack.c.b16 %v703, %v702
    %v713 = vpack.c.b16 %v705, %v704
    %v738 = vunpack.c.l.b16 %v396
    %v739 = vunpack.c.l.b16 %v397
    %v740 = vunpack.c.l.b16 %v398
    %v741 = vunpack.c.l.b16 %v399
    %v742 = vunpack.c.l.b16 %v400
    %v743 = vunpack.c.l.b16 %v401
    %v744 = vunpack.c.l.b16 %v402
    %v745 = vunpack.c.l.b16 %v403
    %v746 = vunpack.c.l.b16 %v404
    %v747 = vunpack.c.l.b16 %v405
    %v748 = vunpack.c.l.b16 %v406
    %v749 = vunpack.c.l.b16 %v407
    %v750 = vunpack.c.l.b16 %v408
    %v751 = vunpack.c.l.b16 %v409
    %v752 = vunpack.c.l.b16 %v410
    %v753 = vunpack.c.l.b16 %v411
    %v754 = vpack.c.b16 %v739, %v738
    %v755 = vpack.c.b16 %v741, %v740
    %v756 = vpack.c.b16 %v743, %v742
    %v757 = vpack.c.b16 %v745, %v744
    %v758 = vpack.c.b16 %v747, %v746
    %v759 = vpack.c.b16 %v749, %v748
    %v760 = vpack.c.b16 %v751, %v750
    %v761 = vpack.c.b16 %v753, %v752
    %v770 = vld [vmem:[#allocation6] sm:$0xf]
    %v771 = vld [vmem:[#allocation6 + $0x4] sm:$0xf]
    %v772 = vld [vmem:[#allocation6 + $0x8] sm:$0xf]
    %v773 = vld [vmem:[#allocation6 + $0xc] sm:$0xf]
    %v774 = vld [vmem:[#allocation6 + $0x10] sm:$0xf]
    %v775 = vld [vmem:[#allocation6 + $0x14] sm:$0xf]
    %v776 = vld [vmem:[#allocation6 + $0x18] sm:$0xf]
    %v777 = vld [vmem:[#allocation6 + $0x1c] sm:$0xf]
    %v778 = vld [vmem:[#allocation6 + $0x20] sm:$0xf]
    %v779 = vld [vmem:[#allocation6 + $0x24] sm:$0xf]
    %v780 = vld [vmem:[#allocation6 + $0x28] sm:$0xf]
    %v781 = vld [vmem:[#allocation6 + $0x2c] sm:$0xf]
    %v782 = vld [vmem:[#allocation6 + $0x30] sm:$0xf]
    %v783 = vld [vmem:[#allocation6 + $0x34] sm:$0xf]
    %v784 = vld [vmem:[#allocation6 + $0x38] sm:$0xf]
    %v785 = vld [vmem:[#allocation6 + $0x3c] sm:$0xf]
    %v786 = vld [vmem:[#allocation6 + $0x40] sm:$0xf]
    %v787 = vld [vmem:[#allocation6 + $0x44] sm:$0xf]
    %v788 = vld [vmem:[#allocation6 + $0x48] sm:$0xf]
    %v789 = vld [vmem:[#allocation6 + $0x4c] sm:$0xf]
    %v790 = vld [vmem:[#allocation6 + $0x50] sm:$0xf]
    %v791 = vld [vmem:[#allocation6 + $0x54] sm:$0xf]
    %v792 = vld [vmem:[#allocation6 + $0x58] sm:$0xf]
    %v793 = vld [vmem:[#allocation6 + $0x5c] sm:$0xf]
    %v794 = vld [vmem:[#allocation6 + $0x60] sm:$0xf]
    %v795 = vld [vmem:[#allocation6 + $0x64] sm:$0xf]
    %v796 = vld [vmem:[#allocation6 + $0x68] sm:$0xf]
    %v797 = vld [vmem:[#allocation6 + $0x6c] sm:$0xf]
    %v798 = vld [vmem:[#allocation6 + $0x70] sm:$0xf]
    %v799 = vld [vmem:[#allocation6 + $0x74] sm:$0xf]
    %v800 = vld [vmem:[#allocation6 + $0x78] sm:$0xf]
    %v801 = vld [vmem:[#allocation6 + $0x7c] sm:$0xf]
    %v802 = vld [vmem:[%s6] sm:$0x1]
    %v804 = vperm.slane %v802, 0
    %v838 = vunpack.c.l.b16 %v770
    %v839 = vunpack.c.l.b16 %v771
    %v840 = vunpack.c.l.b16 %v772
    %v841 = vunpack.c.l.b16 %v773
    %v842 = vunpack.c.l.b16 %v774
    %v843 = vunpack.c.l.b16 %v775
    %v844 = vunpack.c.l.b16 %v776
    %v845 = vunpack.c.l.b16 %v777
    %v846 = vunpack.c.l.b16 %v778
    %v847 = vunpack.c.l.b16 %v779
    %v848 = vunpack.c.l.b16 %v780
    %v849 = vunpack.c.l.b16 %v781
    %v850 = vunpack.c.l.b16 %v782
    %v851 = vunpack.c.l.b16 %v783
    %v852 = vunpack.c.l.b16 %v784
    %v853 = vunpack.c.l.b16 %v785
    %v854 = vunpack.c.l.b16 %v786
    %v855 = vunpack.c.l.b16 %v787
    %v856 = vunpack.c.l.b16 %v788
    %v857 = vunpack.c.l.b16 %v789
    %v858 = vunpack.c.l.b16 %v790
    %v859 = vunpack.c.l.b16 %v791
    %v860 = vunpack.c.l.b16 %v792
    %v861 = vunpack.c.l.b16 %v793
    %v862 = vunpack.c.l.b16 %v794
    %v863 = vunpack.c.l.b16 %v795
    %v864 = vunpack.c.l.b16 %v796
    %v865 = vunpack.c.l.b16 %v797
    %v866 = vunpack.c.l.b16 %v798
    %v867 = vunpack.c.l.b16 %v799
    %v868 = vunpack.c.l.b16 %v800
    %v869 = vunpack.c.l.b16 %v801
    %v870 = vpack.c.b16 %v839, %v838
    %v871 = vpack.c.b16 %v841, %v840
    %v872 = vpack.c.b16 %v843, %v842
    %v873 = vpack.c.b16 %v845, %v844
    %v874 = vpack.c.b16 %v847, %v846
    %v875 = vpack.c.b16 %v849, %v848
    %v876 = vpack.c.b16 %v851, %v850
    %v877 = vpack.c.b16 %v853, %v852
    %v878 = vpack.c.b16 %v855, %v854
    %v879 = vpack.c.b16 %v857, %v856
    %v880 = vpack.c.b16 %v859, %v858
    %v881 = vpack.c.b16 %v861, %v860
    %v882 = vpack.c.b16 %v863, %v862
    %v883 = vpack.c.b16 %v865, %v864
    %v884 = vpack.c.b16 %v867, %v866
    %v885 = vpack.c.b16 %v869, %v868
    %902 = vmatpush.bf16.msra.mxu0 %v877
    %903 = vmatpush.bf16.msra.mxu0 %v876
    %904 = vmatpush.bf16.msra.mxu0 %v875
    %905 = vmatpush.bf16.msra.mxu0 %v874
    %906 = vmatpush.bf16.msra.mxu0 %v873
    %907 = vmatpush.bf16.msra.mxu0 %v872
    %908 = vmatpush.bf16.msra.mxu0 %v871
    %909 = vmatpush.bf16.msra.mxu0 %v870
    %910 = vmatmul.bf16.gmra.mxu0 %v706
    %v911 = vpop.f32.mrf.mxu0
    %v912 = vadd.f32 %v804, %v911
    %v913 = vpop.f32.mrf.mxu0
    %v914 = vadd.f32 %v804, %v913
    %915 = vmatmul.bf16.gmra.mxu0 %v707
    %v916 = vpop.f32.mrf.mxu0
    %v917 = vadd.f32 %v804, %v916
    %v918 = vpop.f32.mrf.mxu0
    %v919 = vadd.f32 %v804, %v918
    %920 = vmatmul.bf16.gmra.mxu0 %v708
    %v921 = vpop.f32.mrf.mxu0
    %v922 = vadd.f32 %v804, %v921
    %v923 = vpop.f32.mrf.mxu0
    %v924 = vadd.f32 %v804, %v923
    %925 = vmatmul.bf16.gmra.mxu0 %v709
    %v926 = vpop.f32.mrf.mxu0
    %v927 = vadd.f32 %v804, %v926
    %v928 = vpop.f32.mrf.mxu0
    %v929 = vadd.f32 %v804, %v928
    %930 = vmatmul.bf16.gmra.mxu0 %v710
    %v931 = vpop.f32.mrf.mxu0
    %v932 = vadd.f32 %v804, %v931
    %v933 = vpop.f32.mrf.mxu0
    %v934 = vadd.f32 %v804, %v933
    %935 = vmatmul.bf16.gmra.mxu0 %v711
    %v936 = vpop.f32.mrf.mxu0
    %v937 = vadd.f32 %v804, %v936
    %v938 = vpop.f32.mrf.mxu0
    %v939 = vadd.f32 %v804, %v938
    %940 = vmatmul.bf16.gmra.mxu0 %v712
    %v941 = vpop.f32.mrf.mxu0
    %v942 = vadd.f32 %v804, %v941
    %v943 = vpop.f32.mrf.mxu0
    %v944 = vadd.f32 %v804, %v943
    %945 = vmatmul.bf16.gmra.mxu0 %v713
    %v946 = vpop.f32.mrf.mxu0
    %v947 = vadd.f32 %v804, %v946
    %v948 = vpop.f32.mrf.mxu0
    %v949 = vadd.f32 %v804, %v948
    %950 = vdwg.mxu0
    %951 = vmatpush.bf16.msra.mxu0 %v885
    %952 = vmatpush.bf16.msra.mxu0 %v884
    %953 = vmatpush.bf16.msra.mxu0 %v883
    %954 = vmatpush.bf16.msra.mxu0 %v882
    %955 = vmatpush.bf16.msra.mxu0 %v881
    %956 = vmatpush.bf16.msra.mxu0 %v880
    %957 = vmatpush.bf16.msra.mxu0 %v879
    %958 = vmatpush.bf16.msra.mxu0 %v878
    %959 = vmatmul.bf16.gmra.mxu0 %v754
    %v960 = vpop.f32.mrf.mxu0
    %v961 = vadd.f32 %v912, %v960
    %v962 = vpop.f32.mrf.mxu0
    %v963 = vadd.f32 %v914, %v962
    %964 = vmatmul.bf16.gmra.mxu0 %v755
    %v965 = vpop.f32.mrf.mxu0
    %v966 = vadd.f32 %v917, %v965
    %v967 = vpop.f32.mrf.mxu0
    %v968 = vadd.f32 %v919, %v967
    %969 = vmatmul.bf16.gmra.mxu0 %v756
    %v970 = vpop.f32.mrf.mxu0
    %v971 = vadd.f32 %v922, %v970
    %v972 = vpop.f32.mrf.mxu0
    %v973 = vadd.f32 %v924, %v972
    %974 = vmatmul.bf16.gmra.mxu0 %v757
    %v975 = vpop.f32.mrf.mxu0
    %v976 = vadd.f32 %v927, %v975
    %v977 = vpop.f32.mrf.mxu0
    %v978 = vadd.f32 %v929, %v977
    %979 = vmatmul.bf16.gmra.mxu0 %v758
    %v980 = vpop.f32.mrf.mxu0
    %v981 = vadd.f32 %v932, %v980
    %v982 = vpop.f32.mrf.mxu0
    %v983 = vadd.f32 %v934, %v982
    %984 = vmatmul.bf16.gmra.mxu0 %v759
    %v985 = vpop.f32.mrf.mxu0
    %v986 = vadd.f32 %v937, %v985
    %v987 = vpop.f32.mrf.mxu0
    %v988 = vadd.f32 %v939, %v987
    %989 = vmatmul.bf16.gmra.mxu0 %v760
    %v990 = vpop.f32.mrf.mxu0
    %v991 = vadd.f32 %v942, %v990
    %v992 = vpop.f32.mrf.mxu0
    %v993 = vadd.f32 %v944, %v992
    %994 = vmatmul.bf16.gmra.mxu0 %v761
    %v995 = vpop.f32.mrf.mxu0
    %v996 = vadd.f32 %v947, %v995
    %v997 = vpop.f32.mrf.mxu0
    %v998 = vadd.f32 %v949, %v997
    %999 = vdwg.mxu0
    %v1000 = vmax.f32 %v961, 0.0
    %v1001 = vmax.f32 %v963, 0.0
    %v1002 = vmax.f32 %v966, 0.0
    %v1003 = vmax.f32 %v968, 0.0
    %v1004 = vmax.f32 %v971, 0.0
    %v1005 = vmax.f32 %v973, 0.0
    %v1006 = vmax.f32 %v976, 0.0
    %v1007 = vmax.f32 %v978, 0.0
    %v1008 = vmax.f32 %v981, 0.0
    %v1009 = vmax.f32 %v983, 0.0
    %v1010 = vmax.f32 %v986, 0.0
    %v1011 = vmax.f32 %v988, 0.0
    %v1012 = vmax.f32 %v991, 0.0
    %v1013 = vmax.f32 %v993, 0.0
    %v1014 = vmax.f32 %v996, 0.0
    %v1015 = vmax.f32 %v998, 0.0
    %v1016 = vld [vmem:[%s7] sm:$0x1]
    %v1017 = vld [vmem:[#allocation2] sm:$0x1]
    %1019 = vset.pattern.permute.xlu0 0
    %1020 = vperm.xlu0 %1019, %v1017
    %v1021 = vpop.permute.xlu0 %1020
    %v1023 = vperm.slane %v1021, 0
    %1024 = vmatpush.xpose.msra.mxu0 %v1015
    %1025 = vmatpush.xpose.msra.mxu0 %v1014
    %1026 = vmatpush.xpose.msra.mxu0 %v1013
    %1027 = vmatpush.xpose.msra.mxu0 %v1012
    %1028 = vmatpush.xpose.msra.mxu0 %v1011
    %1029 = vmatpush.xpose.msra.mxu0 %v1010
    %1030 = vmatpush.xpose.msra.mxu0 %v1009
    %1031 = vmatpush.xpose.msra.mxu0 %v1008
    %1032 = vmatpush.xpose.msra.mxu0 %v1007
    %1033 = vmatpush.xpose.msra.mxu0 %v1006
    %1034 = vmatpush.xpose.msra.mxu0 %v1005
    %1035 = vmatpush.xpose.msra.mxu0 %v1004
    %1036 = vmatpush.xpose.msra.mxu0 %v1003
    %1037 = vmatpush.xpose.msra.mxu0 %v1002
    %1038 = vmatpush.xpose.msra.mxu0 %v1001
    %1039 = vmatpush.xpose.msra.mxu0 %v1000
    %1040 = vmatmul.f32.gmra.mxu0 %v1016
    %v1041 = vpop.f32.mrf.mxu0
    %v1042 = vadd.f32 %v1023, %v1041
    %1043 = vdwg.mxu0
    %1044 = vst [vmem:[#allocation8] sm:$0x1] %v1042
    // Predicated region
    $region46: #{tpu_custom_call.1} parent=1 // pred_check
      _
    $region47: #{tpu_custom_call.1} parent=1 // pred_check_branch
      %1046 = sbr.rel (0) target = $region49
    $region48: #{tpu_custom_call.1} parent=1 // pred_region
      %1048 = vsyncadd [#allocation5], 0
      %s1050 = sshll.u32 [#allocation8], 4
      %s1051 = int_to_ptr.vmem [resolvable:$true] %s1050
      %s1052 = sshll.u32 %s9, 4
      %s1053 = int_to_ptr.hbm [resolvable:$true] %s1052
      %1055 = dma.vmem_to_hbm [thread:$0]  %s1051, 16, %s1053, [#allocation5]
    $region49: #{tpu_custom_call.1} parent=1 // pred_fallthru
      _
    // Predicated region
    $region50: #{tpu_custom_call.1} parent=1 // pred_check
      _
    $region51: #{tpu_custom_call.1} parent=1 // pred_check_branch
      %1057 = sbr.rel (0) target = $region53
    $region52: #{tpu_custom_call.1} parent=1 // pred_region
      %1059 = dma.done [#allocation5], 16
    $region53: #{tpu_custom_call.1} parent=1 // pred_fallthru
      _
    %1060 = vsyncpa [#allocation4], 1
    %1061 = vsyncpa [#allocation7], 1
    %1062 = vsyncpa [#allocation5], 1

</llo_original>
